<compile_context>
chip_gen: v7x
topology: tpu7x:2x2x1
jax: 0.10.0
libtpu: 0.0.40
codegen_flags: <defaults>
</compile_context>

<pallas_src>
import jax
import jax.numpy as jnp
from jax.experimental import pallas as pl
from jax.experimental.pallas import tpu as pltpu


# ---------------------------------------------------------------------------
# Config (small, consistent with the module's forward)
# ---------------------------------------------------------------------------
BATCH = 4
ENC_IN = 4
SEQ_LEN = 48
PRED_LEN = 32
PERIOD_LEN = 8
SPARSE_K = 4

SEG_NUM_X = SEQ_LEN // PERIOD_LEN   # 6
SEG_NUM_Y = PRED_LEN // PERIOD_LEN  # 4
K1 = 1 + 2 * (PERIOD_LEN // 2)      # conv1d kernel size = 9, padding = 4
K2 = 1 + 2 * (PERIOD_LEN // 8)      # conv1d2 kernel size = 3, padding = 1

PADDED_OUT = 128                    # lane-dense output width (avoid masked vst)


# ---------------------------------------------------------------------------
# Pallas kernel: one MXU push, no VPU/XLU work
# ---------------------------------------------------------------------------
def sparsetsf_kernel(x_ref, w_ref, o_ref):
    o_ref[...] = jnp.dot(x_ref[...], w_ref[...],
                         preferred_element_type=jnp.float32).astype(o_ref.dtype)


def run_model_pallas(x_rows, w_final):
    R, _ = x_rows.shape
    PN = w_final.shape[1]
    # Tiny problem (16x48 f32 activations, 48x128 f32 weights, ~27 KB total):
    # single invocation (no grid), whole arrays resident in VMEM.
    return pl.pallas_call(
        sparsetsf_kernel,
        out_shape=jax.ShapeDtypeStruct((R, PN), jnp.float32),
        in_specs=[
            pl.BlockSpec(memory_space=pltpu.MemorySpace.VMEM),
            pl.BlockSpec(memory_space=pltpu.MemorySpace.VMEM),
        ],
        out_specs=pl.BlockSpec(memory_space=pltpu.MemorySpace.VMEM),
    )(x_rows, w_final)


# ---------------------------------------------------------------------------
# Parameter construction (plain JAX glue — parameter-only, batch-independent)
# ---------------------------------------------------------------------------
def banded_conv_matrix(w, L):
    """M[j, t] = w[j - t + P] (zero padding), so that conv1d(x) == x @ M."""
    K = w.shape[0]
    Pd = K // 2
    j = jnp.arange(L)[:, None]
    t = jnp.arange(L)[None, :]
    idx = j - t + Pd
    valid = (idx >= 0) & (idx < K)
    return jnp.where(valid, w[jnp.clip(idx, 0, K - 1)], 0.0).astype(jnp.float32)


def build_effective_weights(params):
    conv1_w, conv2_w, adj_weight, out_proj, period_enh = params

    m1 = banded_conv_matrix(conv1_w, SEQ_LEN)                    # (L, L)
    m2 = banded_conv_matrix(conv2_w, SEQ_LEN)                    # (L, L)

    # period enhancement: softmax over period dim, tiled across segments;
    # elementwise scale along the sequence == right-multiply by diag(pw_full)
    pw = jax.nn.softmax(period_enh[:, 0], axis=0)                # (period_len,)
    pw_full = jnp.tile(pw, SEG_NUM_X)                            # (L,)

    # GraphModule: top-k mask (zeros kept, NOT -inf — exact PyTorch semantics),
    # softmax, then adj @ out_proj; the surrounding permute/reshape folds into
    # kron(A_eff, I_period).
    _, idx = jax.lax.top_k(adj_weight, SPARSE_K)                 # (Sx, k)
    mask = jnp.sum(jax.nn.one_hot(idx, SEG_NUM_X, dtype=jnp.float32), axis=1)
    adj_sm = jax.nn.softmax(adj_weight * mask, axis=-1)
    a_eff = adj_sm @ out_proj                                    # (Sx, Sy)
    w_big = jnp.kron(a_eff, jnp.eye(PERIOD_LEN, dtype=jnp.float32))  # (L, pred)

    eye = jnp.eye(SEQ_LEN, dtype=jnp.float32)
    # x1 = x0 @ (M1 diag(pw) + I); x2 = x1 @ (M2 + I); y0 = x2 @ W_big
    w_total = (m1 * pw_full[None, :] + eye) @ (m2 + eye) @ w_big  # (L, pred)

    # fold mean subtract / add-back:  y = x @ [(I - J/L) @ W_total + ones/L]
    j_over_l = jnp.full((SEQ_LEN, SEQ_LEN), 1.0 / SEQ_LEN, dtype=jnp.float32)
    w_final = (eye - j_over_l) @ w_total + jnp.full(
        (SEQ_LEN, PRED_LEN), 1.0 / SEQ_LEN, dtype=jnp.float32)

    # pad output columns to 128 so the kernel's stores are lane-dense
    return jnp.pad(w_final, ((0, 0), (0, PADDED_OUT - PRED_LEN)))


def model_forward(x, params):
    """x: (B, seq_len, enc_in) -> (B, pred_len, enc_in)  [matches PyTorch Model]."""
    B, L, C = x.shape
    w_final = build_effective_weights(params)                    # (L, 128)
    # rows layout: (B*enc_in, seq_len)
    x_rows = jnp.transpose(x, (0, 2, 1)).reshape(B * C, L).astype(jnp.float32)
    y_rows = run_model_pallas(x_rows, w_final)[:, :PRED_LEN]     # (B*C, pred_len)
    y = y_rows.reshape(B, C, PRED_LEN)
    return jnp.transpose(y, (0, 2, 1))                           # (B, pred, enc_in)


# ---------------------------------------------------------------------------
# Pure-JAX reference (mirrors PyTorch forward op-by-op) for correctness check
# ---------------------------------------------------------------------------
def ref_forward(x, params):
    conv1_w, conv2_w, adj_weight, out_proj, period_enh = params
    B, L, C = x.shape
    seq_mean = jnp.mean(x, axis=1, keepdims=True)                # (B,1,C)
    xt = jnp.transpose(x - seq_mean, (0, 2, 1)).reshape(-1, L)   # (B*C, L)

    def conv(rows, w):
        K = w.shape[0]
        Pd = K // 2
        xp = jnp.pad(rows, ((0, 0), (Pd, Pd)))
        return sum(w[k] * xp[:, k:k + L] for k in range(K))

    xc = conv(xt, conv1_w)
    pw = jax.nn.softmax(period_enh[:, 0], axis=0)
    xc = (xc.reshape(-1, SEG_NUM_X, PERIOD_LEN) * pw[None, None, :]).reshape(-1, L)
    x1 = xc + xt
    x2 = conv(x1, conv2_w) + x1
    xp3 = jnp.transpose(x2.reshape(-1, SEG_NUM_X, PERIOD_LEN), (0, 2, 1))

    _, idx = jax.lax.top_k(adj_weight, SPARSE_K)
    mask = jnp.sum(jax.nn.one_hot(idx, SEG_NUM_X, dtype=jnp.float32), axis=1)
    adj = jax.nn.softmax(adj_weight * mask, axis=-1)
    y = xp3 @ adj @ out_proj                                     # (B*C, period, Sy)
    y = jnp.transpose(y, (0, 2, 1)).reshape(B, C, PRED_LEN)
    return jnp.transpose(y, (0, 2, 1)) + seq_mean


# ---------------------------------------------------------------------------
if __name__ == "__main__":
    key = jax.random.PRNGKey(0)
    k_x, k_c1, k_c2, k_adj, k_op, k_pe = jax.random.split(key, 6)

    x = jax.random.normal(k_x, (BATCH, SEQ_LEN, ENC_IN), dtype=jnp.float32)

    # Deterministic parameter init (shapes from the module's __init__)
    conv1_w = jax.random.normal(k_c1, (K1,), dtype=jnp.float32) * (1.0 / K1)
    conv2_w = jax.random.normal(k_c2, (K2,), dtype=jnp.float32) * (1.0 / K2)
    adj_weight = jax.random.normal(k_adj, (SEG_NUM_X, SEG_NUM_X),
                                   dtype=jnp.float32) / (SEG_NUM_X ** 0.5)
    out_proj = jax.random.normal(k_op, (SEG_NUM_X, SEG_NUM_Y),
                                 dtype=jnp.float32) / (SEG_NUM_X ** 0.5)
    period_enh = jax.random.normal(k_pe, (PERIOD_LEN, 1),
                                   dtype=jnp.float32) / PERIOD_LEN
    params = (conv1_w, conv2_w, adj_weight, out_proj, period_enh)

    y_kernel = jax.block_until_ready(model_forward(x, params))
    y_ref = jax.block_until_ready(ref_forward(x, params))

    assert y_kernel.shape == (BATCH, PRED_LEN, ENC_IN)
    assert jnp.allclose(y_kernel, y_ref, atol=1e-4, rtol=1e-4), (
        float(jnp.max(jnp.abs(y_kernel - y_ref))))
    print("KERNEL_OK")
</pallas_src>

<mosaic_0001>
module attributes {stable_mosaic.version = 11 : i64} {
  func.func @sparsetsf_kernel(%arg0: memref<16x48xf32, #tpu.memory_space<vmem>>, %arg1: memref<48x128xf32, #tpu.memory_space<vmem>>, %arg2: memref<16x128xf32, #tpu.memory_space<vmem>>) attributes {dimension_semantics = [], scalar_prefetch = 0 : i64, scratch_operands = 0 : i64, tpu.core_type = #tpu.core_type<tc>} {
    %c0 = arith.constant 0 : index
    %c0_0 = arith.constant 0 : index
    %0 = vector.load %arg0[%c0, %c0_0] : memref<16x48xf32, #tpu.memory_space<vmem>>, vector<16x48xf32>
    %c0_1 = arith.constant 0 : index
    %c0_2 = arith.constant 0 : index
    %1 = vector.load %arg1[%c0_1, %c0_2] : memref<48x128xf32, #tpu.memory_space<vmem>>, vector<48x128xf32>
    %cst = arith.constant dense<0.000000e+00> : vector<16x128xf32>
    %2 = tpu.matmul %0, %1, %cst {dimension_numbers = #tpu.dot_dimension_numbers<[1], [0], [0], [1], [0, 0, 1, 1], [], []>} : vector<16x48xf32>, vector<48x128xf32>, vector<16x128xf32> -> vector<16x128xf32>
    %c0_3 = arith.constant 0 : index
    %c0_4 = arith.constant 0 : index
    %3 = vector.load %arg2[%c0_3, %c0_4] : memref<16x128xf32, #tpu.memory_space<vmem>>, vector<16x128xf32>
    tpu.vector_store %arg2[%c0_3, %c0_4], %2 {strides = array<i32>} : memref<16x128xf32, #tpu.memory_space<vmem>>, vector<16x128xf32>,
    return
  }
}

</mosaic_0001>

<llo_original>
// kernel: tpu_custom_call.1
$region0: #{tpu_custom_call.1}
  #allocation0 [shape = 'u32[]', space=smem, size = 0x4, offset = 0x4, fixed_abs, tag = 'smem constant byte address 0x4 - core index']
  #allocation1 [shape = 'u32[144,128]{1,0:T(1,128)}', space=vmem, size = 0x12000, scoped, tag = 'internal scratch']
  %s0 = inlined_call_operand.hbm [shape: f32[16,48], index: 0, kind: input, shape index: {}]
  %s1 = inlined_call_operand.hbm [shape: f32[48,128], index: 1, kind: input, shape index: {}]
  %s2 = inlined_call_operand.hbm [shape: f32[16,128], index: 2, kind: output, shape index: {}]
  %s3 = sld [smem:[#allocation0]]
  $region26: #{tpu_custom_call.1} parent=0
    _
  %s5 = ssub.s32 1, %s3
  %s6 = scalar_select 0, %s5, %s3
  $region1: #{tpu_custom_call.1} parent=0
    #allocation2 [shape = 'u8[8192]{0}', space=vmem, size = 0x2000, scoped, tag = 'input window, operand 0, single buffered']
    #allocation3 [shape = 's32[1]{0}', space=sflag, size = 0x4, scoped, tag = 'scoped memory for tpu_custom_call.1']
    #allocation4 [shape = 's32[1]{0}', space=sflag, size = 0x4, scoped, tag = 'scoped memory for tpu_custom_call.1']
    #allocation5 [shape = 'u8[24576]{0}', space=vmem, size = 0x6000, scoped, tag = 'input window, operand 1, single buffered']
    #allocation6 [shape = 's32[1]{0}', space=sflag, size = 0x4, scoped, tag = 'scoped memory for tpu_custom_call.1']
    #allocation7 [shape = 'u8[8192]{0}', space=vmem, size = 0x2000, scoped, tag = 'output window, operand 0, single buffered']
    %7 = vsyncpa [#allocation3], 0
    %8 = vsyncpa [#allocation6], 0
    %9 = vsyncpa [#allocation4], 0
    // Predicated region
    $region2: #{tpu_custom_call.1} parent=1 // pred_check
      _
    $region3: #{tpu_custom_call.1} parent=1 // pred_check_branch
      %11 = sbr.rel (0) target = $region5
    $region4: #{tpu_custom_call.1} parent=1 // pred_region
      %s13 = ssub.s32 256, 256
      %14 = vsyncadd [#allocation3], %s13
      %s15 = sshll.u32 [#allocation2], 4
      %s16 = int_to_ptr.vmem [resolvable:$true] %s15
      %21 = dma.hbm_to_vmem [thread:$0]  %s0, 256, %s16, [#allocation3], 128, 128, 8
    $region5: #{tpu_custom_call.1} parent=1 // pred_fallthru
      _
    // Predicated region
    $region6: #{tpu_custom_call.1} parent=1 // pred_check
      _
    $region7: #{tpu_custom_call.1} parent=1 // pred_check_branch
      %23 = sbr.rel (0) target = $region9
    $region8: #{tpu_custom_call.1} parent=1 // pred_region
      %s25 = ssub.s32 768, 768
      %26 = vsyncadd [#allocation6], %s25
      %s27 = sshll.u32 [#allocation5], 4
      %s28 = int_to_ptr.vmem [resolvable:$true] %s27
      %33 = dma.hbm_to_vmem [thread:$0]  %s1, 768, %s28, [#allocation6], 128, 128, 8
    $region9: #{tpu_custom_call.1} parent=1 // pred_fallthru
      _
    // Predicated region
    $region10: #{tpu_custom_call.1} parent=1 // pred_check
      _
    $region11: #{tpu_custom_call.1} parent=1 // pred_check_branch
      %35 = sbr.rel (0) target = $region13
    $region12: #{tpu_custom_call.1} parent=1 // pred_region
      %36 = dma.done [#allocation3], 256
    $region13: #{tpu_custom_call.1} parent=1 // pred_fallthru
      _
    // Predicated region
    $region14: #{tpu_custom_call.1} parent=1 // pred_check
      _
    $region15: #{tpu_custom_call.1} parent=1 // pred_check_branch
      %38 = sbr.rel (0) target = $region17
    $region16: #{tpu_custom_call.1} parent=1 // pred_region
      %39 = dma.done [#allocation6], 768
    $region17: #{tpu_custom_call.1} parent=1 // pred_fallthru
      _
    %v40 = vld [vmem:[#allocation2] sm:$0xff]
    %v41 = vld [vmem:[#allocation2 + $0x8] sm:$0xff]
    %v42 = vld [vmem:[#allocation5] sm:$0xff]
    %v43 = vld [vmem:[#allocation5 + $0x8] sm:$0xff]
    %v44 = vld [vmem:[#allocation5 + $0x10] sm:$0xff]
    %v45 = vld [vmem:[#allocation5 + $0x18] sm:$0xff]
    %v46 = vld [vmem:[#allocation5 + $0x20] sm:$0xff]
    %v47 = vld [vmem:[#allocation5 + $0x28] sm:$0xff]
    %vm48 = vcmask 392192
    %v50 = vsel %vm48, %v40, 0
    %v53 = vsel %vm48, %v41, 0
    %55 = vmatprep.subr.mxu0 0.0
    %56 = vmatpush1.msra.mxu0 %v42
    %57 = vmatprep.subr.mxu0 0.0
    %58 = vmatpush1.msra.mxu0 %v43
    %59 = vmatprep.subr.mxu0 0.0
    %60 = vmatpush1.msra.mxu0 %v44
    %61 = vmatprep.subr.mxu0 0.0
    %62 = vmatpush1.msra.mxu0 %v45
    %63 = vmatprep.subr.mxu0 0.0
    %64 = vmatpush1.msra.mxu0 %v46
    %65 = vmatprep.subr.mxu0 0.0
    %66 = vmatpush1.msra.mxu0 %v47
    %67 = vmatprep.subr.mxu0 0.0
    %68 = vmatpush1.msra.mxu0 0.0
    %69 = vmatprep.subr.mxu0 0.0
    %70 = vmatpush1.msra.mxu0 0.0
    %71 = vmatprep.subr.mxu0 0.0
    %72 = vmatpush1.msra.mxu0 0.0
    %73 = vmatprep.subr.mxu0 0.0
    %74 = vmatpush1.msra.mxu0 0.0
    %75 = vmatprep.subr.mxu0 0.0
    %76 = vmatpush1.msra.mxu0 0.0
    %77 = vmatprep.subr.mxu0 0.0
    %78 = vmatpush1.msra.mxu0 0.0
    %79 = vmatprep.subr.mxu0 0.0
    %80 = vmatpush1.msra.mxu0 0.0
    %81 = vmatprep.subr.mxu0 0.0
    %82 = vmatpush1.msra.mxu0 0.0
    %83 = vmatprep.subr.mxu0 0.0
    %84 = vmatpush1.msra.mxu0 0.0
    %85 = vmatprep.subr.mxu0 0.0
    %86 = vmatpush1.msra.mxu0 0.0
    %87 = vmatprep.subr.mxu0 0.0
    %88 = vmatpush1.msra.mxu0 0.0
    %89 = vmatprep.subr.mxu0 0.0
    %90 = vmatpush1.msra.mxu0 0.0
    %91 = vmatprep.subr.mxu0 0.0
    %92 = vmatpush1.msra.mxu0 0.0
    %93 = vmatprep.subr.mxu0 0.0
    %94 = vmatpush1.msra.mxu0 0.0
    %95 = vmatprep.subr.mxu0 0.0
    %96 = vmatpush1.msra.mxu0 0.0
    %97 = vmatprep.subr.mxu0 0.0
    %98 = vmatpush1.msra.mxu0 0.0
    %99 = vmatprep.subr.mxu0 0.0
    %100 = vmatpush1.msra.mxu0 0.0
    %101 = vmatprep.subr.mxu0 0.0
    %102 = vmatpush1.msra.mxu0 0.0
    %103 = vmatprep.subr.mxu0 0.0
    %104 = vmatpush1.msra.mxu0 0.0
    %105 = vmatprep.subr.mxu0 0.0
    %106 = vmatpush1.msra.mxu0 0.0
    %107 = vmatprep.subr.mxu0 0.0
    %108 = vmatpush1.msra.mxu0 0.0
    %109 = vmatprep.subr.mxu0 0.0
    %110 = vmatpush1.msra.mxu0 0.0
    %111 = vmatprep.subr.mxu0 0.0
    %112 = vmatpush1.msra.mxu0 0.0
    %113 = vmatprep.subr.mxu0 0.0
    %114 = vmatpush1.msra.mxu0 0.0
    %115 = vmatprep.subr.mxu0 0.0
    %116 = vmatpush1.msra.mxu0 0.0
    %117 = vmatprep.subr.mxu0 0.0
    %118 = vmatpush1.msra.mxu0 0.0
    %119 = vmatprep.mubr.f32.mxu0 0.0
    %120 = vmatmul.mubr.f32.gmra.mrb[0].mxu0 %v50
    %v121 = vpop.f32.mrb[0].mxu0
    %v122 = vadd.f32 0.0, %v121
    %v123 = vpop.f32.mrb[0].mxu0
    %124 = vmatprep.mubr.f32.mxu0 0.0
    %125 = vmatmul.mubr.f32.gmra.mrb[0].mxu0 %v53
    %v126 = vpop.f32.mrb[0].mxu0
    %v127 = vadd.f32 0.0, %v126
    %v128 = vpop.f32.mrb[0].mxu0
    %129 = vdwg.mxu0
    %130 = vst [vmem:[#allocation7] sm:$0xff] %v122
    %131 = vst [vmem:[#allocation7 + $0x8] sm:$0xff] %v127
    // Predicated region
    $region18: #{tpu_custom_call.1} parent=1 // pred_check
      _
    $region19: #{tpu_custom_call.1} parent=1 // pred_check_branch
      %133 = sbr.rel (0) target = $region21
    $region20: #{tpu_custom_call.1} parent=1 // pred_region
      %s135 = ssub.s32 256, 256
      %136 = vsyncadd [#allocation4], %s135
      %s137 = sshll.u32 [#allocation7], 4
      %s138 = int_to_ptr.vmem [resolvable:$true] %s137
      %143 = dma.vmem_to_hbm [thread:$0]  %s138, 256, %s2, [#allocation4], 128, 128, 8
    $region21: #{tpu_custom_call.1} parent=1 // pred_fallthru
      _
    // Predicated region
    $region22: #{tpu_custom_call.1} parent=1 // pred_check
      _
    $region23: #{tpu_custom_call.1} parent=1 // pred_check_branch
      %145 = sbr.rel (0) target = $region25
    $region24: #{tpu_custom_call.1} parent=1 // pred_region
      %146 = dma.done [#allocation4], 256
    $region25: #{tpu_custom_call.1} parent=1 // pred_fallthru
      _
    %147 = vsyncpa [#allocation3], 1
    %148 = vsyncpa [#allocation6], 1
    %149 = vsyncpa [#allocation4], 1

</llo_original>
